<compile_context>
chip_gen: v7x
topology: tpu7x:2x2x1
jax: 0.10.0
libtpu: 0.0.40
codegen_flags: <defaults>
</compile_context>

<pallas_src>
import math

import numpy as np
import jax
import jax.numpy as jnp
from jax import lax
from jax.experimental import pallas as pl
from jax.experimental.pallas import tpu as pltpu


def _decoder_kernel(adj_ref, z_ref, vec_ref, w1_ref, w2_ref, o_ref):
    """Whole forward pass, whole batch, one un-gridded invocation.

    adj_ref : [D, D]       inverse(I - origin_A^T), f32
    z_ref   : [B, D, Z]    input_z
    vec_ref : [1, Z+H+O]   packed [Wa | b1 | b2]
    w1_ref  : [Z, H]       out_fc1.weight^T   (stored [in, out])
    w2_ref  : [H, O]       out_fc2.weight^T   (stored [in, out])
    o_ref   : [B*D, Z+O]   packed [mat_z | out]
    """
    B, D, Z = z_ref.shape
    H = w1_ref.shape[1]

    vec = vec_ref[...]                      # single small load
    wa = vec[:, :Z]                         # [1, Z]
    b1 = vec[:, Z:Z + H]                    # [1, H]
    b2 = vec[:, Z + H:]                     # [1, O]

    # --- adjacency stage: mat_z[b] = adj_inv @ (z[b] + Wa) - Wa -------------
    z3 = z_ref[...] + wa                    # one VPU broadcast-add, whole batch
    adj_b = jnp.broadcast_to(adj_ref[...], (B, D, D))   # hoisted, done once
    mat_z = lax.dot_general(
        adj_b, z3,
        dimension_numbers=(((2,), (1,)), ((0,), (0,))),  # batch over B, contract D
        preferred_element_type=jnp.float32) - wa         # [B, D, Z]

    # --- MLP stage on the flat [B*D, Z] row slab ----------------------------
    mat_z_flat = mat_z.reshape(B * D, Z)    # leading-dim collapse, no data movement
    h3 = jnp.maximum(
        jnp.dot(mat_z_flat, w1_ref[...], preferred_element_type=jnp.float32) + b1,
        0.0)                                # [B*D, H]
    out = jnp.dot(h3, w2_ref[...], preferred_element_type=jnp.float32) + b2

    # Single merged, lane-denser store: [mat_z | out].
    o_ref[...] = jnp.concatenate([mat_z_flat, out], axis=-1).astype(o_ref.dtype)


@jax.jit
def _decoder_forward(input_z, origin_A, Wa, w1, b1, w2, b2):
    B, D, Z = input_z.shape
    H = w1.shape[1]
    O = w2.shape[1]

    # On-device, differentiable replacement for torch.inverse(I - A^T).
    # Runs in f32 (PyTorch uses .double()); I - A^T is well conditioned here.
    eye = jnp.eye(D, dtype=input_z.dtype)
    adj_inv = jnp.linalg.solve(eye - origin_A.T, eye)

    # Pack the three small vectors into one operand (fewer input DMAs).
    vec = jnp.concatenate([Wa, b1, b2]).reshape(1, Z + H + O)

    cost = pl.CostEstimate(
        flops=2 * B * D * D * Z + 2 * B * D * Z * H + 2 * B * D * H * O,
        transcendentals=0,
        bytes_accessed=4 * (D * D + B * D * Z + (Z + H + O) + Z * H + H * O
                            + B * D * (Z + O)))

    vmem = pl.BlockSpec(memory_space=pltpu.MemorySpace.VMEM)
    slab = pl.pallas_call(
        _decoder_kernel,
        out_shape=jax.ShapeDtypeStruct((B * D, Z + O), jnp.float32),
        in_specs=[vmem] * 5,
        out_specs=vmem,
        cost_estimate=cost,
    )(adj_inv, input_z, vec, w1, w2)

    # Free metadata reshapes / cheap slices back to module layout.
    mat_z = slab[:, :Z].reshape(B, D, Z)
    out = slab[:, Z:].reshape(B, D, O)
    return mat_z, out


def mlp_decoder_pallas(input_z, origin_A, Wa, w1, b1, w2, b2, adj_A_tilt):
    """Returns (mat_z, out, adj_A_tilt) matching MLPDecoder.forward.

    `inputs`, `n_in_node`, `rel_rec`, `rel_send` from the PyTorch signature are
    unused in the reference forward and therefore omitted here.
    Weights are stored pre-transposed as [in_features, out_features].
    """
    mat_z, out = _decoder_forward(input_z, origin_A, Wa, w1, b1, w2, b2)
    return mat_z, out, adj_A_tilt


def xavier_normal(key, shape):
    fan_out, fan_in = shape  # PyTorch nn.Linear weight is [out, in]
    std = math.sqrt(2.0 / (fan_in + fan_out))
    return std * jax.random.normal(key, shape, dtype=jnp.float32)


if __name__ == "__main__":
    # Small, deterministic shapes consistent with the module.
    B = 2                 # batch_size
    D = 8                 # data_variable_size (n nodes)
    Z = 16                # n_in_z
    H = 32                # n_hid
    O = 16                # n_out

    key = jax.random.PRNGKey(0)
    k_z, k_a, k_wa, k_w1, k_w2, k_tilt = jax.random.split(key, 6)

    input_z = jax.random.normal(k_z, (B, D, Z), dtype=jnp.float32)
    origin_A = 0.1 * jax.random.normal(k_a, (D, D), dtype=jnp.float32)
    Wa = jax.random.normal(k_wa, (Z,), dtype=jnp.float32)
    adj_A_tilt = jax.random.normal(k_tilt, (D, D), dtype=jnp.float32)

    # Parameters (init matching init_weights: xavier_normal_, bias=0).
    W1_torch = xavier_normal(k_w1, (H, Z))   # out_fc1.weight [n_hid, n_in_z]
    W2_torch = xavier_normal(k_w2, (O, H))   # out_fc2.weight [n_out, n_hid]
    b1 = jnp.zeros((H,), dtype=jnp.float32)
    b2 = jnp.zeros((O,), dtype=jnp.float32)
    w1 = W1_torch.T                           # pre-transpose to [in, out]
    w2 = W2_torch.T

    mat_z, out, tilt = mlp_decoder_pallas(
        input_z, origin_A, Wa, w1, b1, w2, b2, adj_A_tilt)
    jax.block_until_ready((mat_z, out, tilt))

    # --- correctness: pure-JAX f32 reference (same on-device solve) ---------
    eye = jnp.eye(D, dtype=jnp.float32)
    adj_inv_ref = jnp.linalg.solve(eye - origin_A.T, eye)
    mat_z_ref = jnp.einsum("ij,bjz->biz", adj_inv_ref, input_z + Wa) - Wa
    h3_ref = jnp.maximum(mat_z_ref @ w1 + b1, 0.0)
    out_ref = h3_ref @ w2 + b2
    assert jnp.allclose(mat_z, mat_z_ref, atol=1e-4, rtol=1e-4)
    assert jnp.allclose(out, out_ref, atol=1e-4, rtol=1e-4)
    assert jnp.array_equal(tilt, adj_A_tilt)

    # --- fidelity of the f32 on-device inverse vs PyTorch's .double() path --
    A64 = np.asarray(origin_A, dtype=np.float64)
    adj_inv64 = np.linalg.inv(np.eye(D, dtype=np.float64) - A64.T)
    mat_z64 = np.einsum("ij,bjz->biz", adj_inv64,
                        np.asarray(input_z, np.float64)
                        + np.asarray(Wa, np.float64)) - np.asarray(Wa, np.float64)
    assert np.allclose(np.asarray(mat_z, np.float64), mat_z64, atol=1e-3)

    print("KERNEL_OK")
</pallas_src>

<mosaic_0001>
module attributes {stable_mosaic.version = 11 : i64} {
  func.func @_decoder_kernel(%arg0: memref<8x8xf32, #tpu.memory_space<vmem>>, %arg1: memref<2x8x16xf32, #tpu.memory_space<vmem>>, %arg2: memref<1x64xf32, #tpu.memory_space<vmem>>, %arg3: memref<16x32xf32, #tpu.memory_space<vmem>>, %arg4: memref<32x16xf32, #tpu.memory_space<vmem>>, %arg5: memref<16x32xf32, #tpu.memory_space<vmem>>) attributes {dimension_semantics = [], scalar_prefetch = 0 : i64, scratch_operands = 0 : i64, tpu.core_type = #tpu.core_type<tc>} {
    %c0 = arith.constant 0 : index
    %c0_0 = arith.constant 0 : index
    %0 = vector.load %arg2[%c0, %c0_0] : memref<1x64xf32, #tpu.memory_space<vmem>>, vector<1x64xf32>
    %1 = vector.extract_strided_slice %0 {offsets = [0, 0], sizes = [1, 16], strides = [1, 1]} : vector<1x64xf32> to vector<1x16xf32>
    %2 = vector.extract_strided_slice %0 {offsets = [0, 16], sizes = [1, 32], strides = [1, 1]} : vector<1x64xf32> to vector<1x32xf32>
    %3 = vector.extract_strided_slice %0 {offsets = [0, 48], sizes = [1, 16], strides = [1, 1]} : vector<1x64xf32> to vector<1x16xf32>
    %c0_1 = arith.constant 0 : index
    %c0_2 = arith.constant 0 : index
    %c0_3 = arith.constant 0 : index
    %4 = vector.load %arg1[%c0_1, %c0_2, %c0_3] : memref<2x8x16xf32, #tpu.memory_space<vmem>>, vector<2x8x16xf32>
    %5 = vector.shape_cast %1 : vector<1x16xf32> to vector<1x1x16xf32>
    %6 = vector.broadcast %5 : vector<1x1x16xf32> to vector<2x8x16xf32>
    %7 = arith.addf %4, %6 : vector<2x8x16xf32>
    %c0_4 = arith.constant 0 : index
    %c0_5 = arith.constant 0 : index
    %8 = vector.load %arg0[%c0_4, %c0_5] : memref<8x8xf32, #tpu.memory_space<vmem>>, vector<8x8xf32>
    %9 = vector.shape_cast %8 : vector<8x8xf32> to vector<1x8x8xf32>
    %10 = vector.broadcast %9 : vector<1x8x8xf32> to vector<2x8x8xf32>
    %cst = arith.constant dense<0.000000e+00> : vector<2x8x16xf32>
    %11 = tpu.matmul %10, %7, %cst {dimension_numbers = #tpu.dot_dimension_numbers<[2], [1], [1], [2], [0, 0, 0, 1, 1, 2], [0], [0]>} : vector<2x8x8xf32>, vector<2x8x16xf32>, vector<2x8x16xf32> -> vector<2x8x16xf32>
    %12 = vector.shape_cast %1 : vector<1x16xf32> to vector<1x1x16xf32>
    %13 = vector.broadcast %12 : vector<1x1x16xf32> to vector<2x8x16xf32>
    %14 = arith.subf %11, %13 : vector<2x8x16xf32>
    %15 = vector.shape_cast %14 : vector<2x8x16xf32> to vector<16x16xf32>
    %c0_6 = arith.constant 0 : index
    %c0_7 = arith.constant 0 : index
    %16 = vector.load %arg3[%c0_6, %c0_7] : memref<16x32xf32, #tpu.memory_space<vmem>>, vector<16x32xf32>
    %cst_8 = arith.constant dense<0.000000e+00> : vector<16x32xf32>
    %17 = tpu.matmul %15, %16, %cst_8 {dimension_numbers = #tpu.dot_dimension_numbers<[1], [0], [0], [1], [0, 0, 1, 1], [], []>} : vector<16x16xf32>, vector<16x32xf32>, vector<16x32xf32> -> vector<16x32xf32>
    %18 = vector.broadcast %2 : vector<1x32xf32> to vector<16x32xf32>
    %19 = arith.addf %17, %18 : vector<16x32xf32>
    %cst_9 = arith.constant 0.000000e+00 : f32
    %20 = vector.broadcast %cst_9 : f32 to vector<16x32xf32>
    %21 = arith.maximumf %19, %20 : vector<16x32xf32>
    %c0_10 = arith.constant 0 : index
    %c0_11 = arith.constant 0 : index
    %22 = vector.load %arg4[%c0_10, %c0_11] : memref<32x16xf32, #tpu.memory_space<vmem>>, vector<32x16xf32>
    %cst_12 = arith.constant dense<0.000000e+00> : vector<16x16xf32>
    %23 = tpu.matmul %21, %22, %cst_12 {dimension_numbers = #tpu.dot_dimension_numbers<[1], [0], [0], [1], [0, 0, 1, 1], [], []>} : vector<16x32xf32>, vector<32x16xf32>, vector<16x16xf32> -> vector<16x16xf32>
    %24 = vector.broadcast %3 : vector<1x16xf32> to vector<16x16xf32>
    %25 = arith.addf %23, %24 : vector<16x16xf32>
    %26 = tpu.concatenate %15, %25 in 1 : vector<16x16xf32>, vector<16x16xf32> -> vector<16x32xf32>
    %c0_13 = arith.constant 0 : index
    %c0_14 = arith.constant 0 : index
    %27 = vector.load %arg5[%c0_13, %c0_14] : memref<16x32xf32, #tpu.memory_space<vmem>>, vector<16x32xf32>
    tpu.vector_store %arg5[%c0_13, %c0_14], %26 {strides = array<i32>} : memref<16x32xf32, #tpu.memory_space<vmem>>, vector<16x32xf32>,
    return
  }
}

</mosaic_0001>

<llo_original>
// kernel: custom-call.8
$region0: #{custom-call.8}
  %s0 = inlined_call_operand.vmem [shape: f32[8,8], index: 0, kind: input, shape index: {}]
  %s1 = inlined_call_operand.vmem [shape: f32[8,8], index: 1, kind: output, shape index: {0}]
  %s2 = inlined_call_operand.hbm [shape: s32[8], index: 2, kind: output, shape index: {1}]
  %s3 = inlined_call_operand.vmem [shape: s32[8], index: 3, kind: output, shape index: {2}]
  %4 = xla_tuple %s1, %s2, %s3
  $region1: #{custom-call.8} parent=0
    #allocation0 [shape = 'u8[4096]{0}', space=vmem, size = 0x1000, scoped, tag = 'operand span for operand 0']
    #allocation1 [shape = 'u8[4096]{0}', space=vmem, size = 0x1000, scoped, tag = 'operand span for operand 1']
    #allocation2 [shape = 'u8[4096]{0}', space=vmem, size = 0x1000, scoped, tag = 'operand span for operand 2']
    #allocation3 [shape = 'u8[512]{0}', space=vmem, size = 0x400, scoped, tag = 'packed  for operand 2']
    #allocation4 [shape = 's32[1]{0}', space=sflag, size = 0x4, scoped, tag = 'scoped memory for custom-call.8']
    #allocation5 [shape = 'u8[4096]{0}', space=vmem, size = 0x1000, scoped, tag = 'operand span for operand 3']
    #allocation6 [shape = 'u8[512]{0}', space=vmem, size = 0x400, scoped, tag = 'packed  for operand 3']
    #allocation7 [shape = 's32[8,128]{1,0}', space=vmem, size = 0x1000, scoped, tag = 'scratch for permutations']
    %5 = vsyncpa [#allocation4], 0
    %p7 = scmp.gt.s32.totalorder 8, 0
    // Predicated region
    $region2: #{custom-call.8} parent=1 // pred_check
      %p8 = pneg %p7
    $region3: #{custom-call.8} parent=1 // pred_check_branch
      %10 = sbr.rel (%p8) target = $region5
    $region4: #{custom-call.8} parent=1 // pred_region
      %s11 = sshra.s32 8, 3
      %p12 = scmp.gt.s32.totalorder %s11, 0
      // Predicated region
      $region6: #{custom-call.8} parent=4 // pred_check
        %p13 = pneg %p12
      $region7: #{custom-call.8} parent=4 // pred_check_branch
        %15 = sbr.rel (%p13) target = $region9
      $region8: #{custom-call.8} parent=4 // pred_region
        %s16 = ssub.s32 %s11, 1
        %s17 = smul.u32 %s16, 128
        %s18 = sshra.s32 %s17, 4
        %s19 = scalar_lea.vmem %s0, %s18
        %v20 = vld [vmem:[%s0] sm:$0xff]
        // While loop
        $region10: #{custom-call.8} parent=8 // loop_pre_header
          _
        $region11: #{custom-call.8} parent=8 // loop_header
          %s21 = sphi %s0, %s43
          %s22 = sphi [#allocation0], %s44
          %v23 = vphi %v20, %v45
          %s24 = ssub.s32 %s19, 64
          %p25 = scmp.gt.s32.totalorder %s21, %s24
        $region12: #{custom-call.8} parent=8 // loop_header_branch
          %27 = sbr.rel (%p25) target = $region16
        $region13: #{custom-call.8} parent=8 // loop_body
          %28 = vst [vmem:[%s22] sm:$0xff] %v23
          %v29 = vld [vmem:[%s21 + $0x8] sm:$0xff]
          %30 = vst [vmem:[%s22 + $0x8] sm:$0xff] %v29
          %v31 = vld [vmem:[%s21 + $0x10] sm:$0xff]
          %32 = vst [vmem:[%s22 + $0x10] sm:$0xff] %v31
          %v33 = vld [vmem:[%s21 + $0x18] sm:$0xff]
          %34 = vst [vmem:[%s22 + $0x18] sm:$0xff] %v33
          %v35 = vld [vmem:[%s21 + $0x20] sm:$0xff]
          %36 = vst [vmem:[%s22 + $0x20] sm:$0xff] %v35
          %v37 = vld [vmem:[%s21 + $0x28] sm:$0xff]
          %38 = vst [vmem:[%s22 + $0x28] sm:$0xff] %v37
          %v39 = vld [vmem:[%s21 + $0x30] sm:$0xff]
          %40 = vst [vmem:[%s22 + $0x30] sm:$0xff] %v39
          %v41 = vld [vmem:[%s21 + $0x38] sm:$0xff]
          %42 = vst [vmem:[%s22 + $0x38] sm:$0xff] %v41
        $region14: #{custom-call.8} parent=8 // loop_footer
          %s43 = scalar_lea.vmem %s21, 64
          %s44 = scalar_lea.vmem %s22, 64
          %v45 = vld [vmem:[%s21 + $0x40] sm:$0xff]
        $region15: #{custom-call.8} parent=8 // loop_footer_branch
          %46 = sbr.rel target = $region11
        $region16: #{custom-call.8} parent=8 // loop_exit
          _
        // While loop
        $region17: #{custom-call.8} parent=8 // loop_pre_header
          _
        $region18: #{custom-call.8} parent=8 // loop_header
          %s47 = sphi %s21, %s55
          %s48 = sphi %s22, %s56
          %v49 = vphi %v23, %v49
          %p50 = scmp.gt.s32.totalorder %s47, %s19
        $region19: #{custom-call.8} parent=8 // loop_header_branch
          %52 = sbr.rel (%p50) target = $region23
        $region20: #{custom-call.8} parent=8 // loop_body
          %v53 = vld [vmem:[%s47] sm:$0xff]
          %54 = vst [vmem:[%s48] sm:$0xff] %v53
        $region21: #{custom-call.8} parent=8 // loop_footer
          %s55 = scalar_lea.vmem %s47, 8
          %s56 = scalar_lea.vmem %s48, 8
        $region22: #{custom-call.8} parent=8 // loop_footer_branch
          %57 = sbr.rel target = $region18
        $region23: #{custom-call.8} parent=8 // loop_exit
          _
      $region9: #{custom-call.8} parent=4 // pred_fallthru
        _
      %s58 = sand.u32 8, 7
      %s59 = sshllo.u32 0, %s58
      %s60 = smul.u32 %s11, 128
      %s61 = sshra.s32 %s60, 4
      %s62 = scalar_lea.vmem [#allocation0], %s61
      %s63 = smul.u32 %s11, 128
      %s64 = sshra.s32 %s63, 4
      %s65 = scalar_lea.vmem %s0, %s64
      %v66 = vld [vmem:[%s65] sm:%s59]
      %67 = vst [vmem:[%s62] sm:%s59] %v66
    $region5: #{custom-call.8} parent=1 // pred_fallthru
      _
    %v68 = vld [vmem:[#allocation0] sm:$0xff]
    %69 = vst [vmem:[#allocation1] sm:$0xff] %v68
    %70 = vst [vmem:[#allocation2] sm:$0x1] 0
    %v71 = vlaneseq
    %v72 = vshrl.u32 %v71, 7
    %v73 = vmov %v72
    %75 = vst [vmem:[#allocation7] sm:$0xff] %v73
    loop: start=0, step=1, limit=8
    $region25: #{custom-call.8} parent=1 // loop_pre_header
      _
    $region26: #{custom-call.8} parent=1 // loop_header
      %s77 = sphi 0, %s81
      %p78 = scmp.ge.s32.totalorder %s77, 8
    $region27: #{custom-call.8} parent=1 // loop_header_branch
      %80 = sbr.rel (%p78) target = $region31
    $region28: #{custom-call.8} parent=1 // loop_body
      %v82 = vstv %s77
      %v83 = vlaneseq
      %v84 = vshrl.u32 %v83, 7
      %v85 = vmov %v84
      %v86 = vld [vmem:[#allocation1] sm:$0xff]
      %v87 = vand.u32 2147483647, %v86
      %v89 = vstv %s77
      %vm90 = vcmp.ge.s32.totalorder %v85, %v89
      %vm91 = vcmp.lt.s32.totalorder %v85, 8
      %vm92 = vmand %vm90, %vm91
      %vm93 = vcmp.lt.f32.partialorder -inf, %v87
      %vm94 = vmand %vm92, %vm93
      %v95 = vsel %vm94, %v85, %v82
      %v96 = vsel %vm94, %v87, -inf
      %v97 = vrot.slane %v96, 1
      %v98 = vrot.slane %v95, 1
      %vm99 = vcmp.ge.f32.partialorder %v97, %v96
      %v100 = vsel %vm99, %v97, %v96
      %v101 = vsel %vm99, %v98, %v95
      %v102 = vrot.slane %v97, 1
      %v103 = vrot.slane %v98, 1
      %vm104 = vcmp.ge.f32.partialorder %v102, %v100
      %v105 = vsel %vm104, %v102, %v100
      %v106 = vsel %vm104, %v103, %v101
      %v107 = vrot.slane %v102, 1
      %v108 = vrot.slane %v103, 1
      %vm109 = vcmp.ge.f32.partialorder %v107, %v105
      %v110 = vsel %vm109, %v107, %v105
      %v111 = vsel %vm109, %v108, %v106
      %v112 = vrot.slane %v107, 1
      %v113 = vrot.slane %v108, 1
      %vm114 = vcmp.ge.f32.partialorder %v112, %v110
      %v115 = vsel %vm114, %v112, %v110
      %v116 = vsel %vm114, %v113, %v111
      %v117 = vrot.slane %v112, 1
      %v118 = vrot.slane %v113, 1
      %vm119 = vcmp.ge.f32.partialorder %v117, %v115
      %v120 = vsel %vm119, %v117, %v115
      %v121 = vsel %vm119, %v118, %v116
      %v122 = vrot.slane %v117, 1
      %v123 = vrot.slane %v118, 1
      %vm124 = vcmp.ge.f32.partialorder %v122, %v120
      %v125 = vsel %vm124, %v122, %v120
      %v126 = vsel %vm124, %v123, %v121
      %v127 = vrot.slane %v122, 1
      %v128 = vrot.slane %v123, 1
      %vm129 = vcmp.ge.f32.partialorder %v127, %v125
      %v130 = vsel %vm129, %v127, %v125
      %v131 = vsel %vm129, %v128, %v126
      %s132 = ssub.s32 128, %s77
      %133 = vrot.lane.b32.xlu0 %v131, %s132
      %v134 = vpop.permute.xlu0 %133
      %s135 = vtos %v134
      %v136 = vstv %s77
      %v137 = vlaneseq
      %v138 = vand.u32 %v137, 127
      %vm139 = vcmp.eq.s32.totalorder %v138, %v136
      %v140 = vstv %s135
      %v141 = vld [vmem:[#allocation2] ss:$0 sm:$0xff]
      %v142 = vsel %vm139, %v140, %v141
      %143 = vst [vmem:[#allocation2] sm:$0x1] %v142
      %s144 = scalar_lea.vmem [#allocation1], %s77
      %s145 = scalar_lea.vmem [#allocation1], %s135
      %v146 = vld [vmem:[%s144] ss:$0 sm:$0xff]
      %v147 = vld [vmem:[%s145] ss:$0 sm:$0xff]
      %148 = vst [vmem:[%s145] sm:$0x1] %v146
      %149 = vst [vmem:[%s144] sm:$0x1] %v147
      %s150 = scalar_lea.vmem [#allocation7], %s77
      %s151 = scalar_lea.vmem [#allocation7], %s135
      %v152 = vld [vmem:[%s150] ss:$0 sm:$0xff]
      %v153 = vld [vmem:[%s151] ss:$0 sm:$0xff]
      %154 = vst [vmem:[%s151] sm:$0x1] %v152
      %155 = vst [vmem:[%s150] sm:$0x1] %v153
      %vm156 = vcmp.ne.f32.partialorder %v147, 0.0
      %vm157 = vmand %vm139, %vm156
      %v158 = vsel %vm157, %v147, 1.0
      %v159 = vlaneseq
      %v160 = vand.u32 %v159, 127
      %v161 = vstv %s77
      %vm162 = vcmp.gt.s32.totalorder %v160, %v161
      %v163 = vsel %vm162, %v147, 0.0
      %v164 = vlaneseq
      %v165 = vshrl.u32 %v164, 7
      %v166 = vmov %v165
      %v167 = vld [vmem:[#allocation1] sm:$0xff]
      %v169 = vstv %s77
      %vm170 = vcmp.gt.s32.totalorder %v166, %v169
      %v171 = vsel %vm170, %v158, 1.0
      %v172 = vrcp.pop %v171
      %v173 = vmul.f32 %v167, %v172
      %vm174 = vmand %vm170, %vm139
      %v175 = vsel %vm174, %v173, 0.0
      %176 = vadd.xlane.f32.xlu0 %v175
      %v177 = vpop.xlane.xlu0 %176
      %v178 = vmul.f32 %v177, %v163
      %v179 = vsub.f32 %v173, %v178
      %180 = vst [vmem:[#allocation1] sm:$0xff] %v179
    $region29: #{custom-call.8} parent=1 // loop_footer
      %s81 = sadd.s32 1, %s77
    $region30: #{custom-call.8} parent=1 // loop_footer_branch
      %76 = sbr.rel target = $region26
    $region31: #{custom-call.8} parent=1 // loop_exit
      _
    %v181 = vld [vmem:[#allocation7] sm:$0xff]
    %s182 = scalar_lea.vmem [#allocation7], 8
    %s183 = scalar_lea.vmem [#allocation7], 16
    %s184 = scalar_lea.vmem [#allocation7], 24
    %s185 = scalar_lea.vmem [#allocation7], 32
    %s186 = scalar_lea.vmem [#allocation7], 40
    %s187 = scalar_lea.vmem [#allocation7], 48
    %s188 = scalar_lea.vmem [#allocation7], 56
    %s189 = scalar_lea.vmem [#allocation7], 64
    %s190 = scalar_lea.vmem [#allocation7], 72
    %s191 = scalar_lea.vmem [#allocation7], 80
    %s192 = scalar_lea.vmem [#allocation7], 88
    %s193 = scalar_lea.vmem [#allocation7], 96
    %s194 = scalar_lea.vmem [#allocation7], 104
    %s195 = scalar_lea.vmem [#allocation7], 112
    %s196 = scalar_lea.vmem [#allocation7], 120
    %197 = vxpose.xlu0.b32.start [1/16] %v181, 128
    %198 = vxpose.xlu0.b32.cont [2/16] 0, 128
    %199 = vxpose.xlu0.b32.cont [3/16] 0, 128
    %200 = vxpose.xlu0.b32.cont [4/16] 0, 128
    %201 = vxpose.xlu0.b32.cont [5/16] 0, 128
    %202 = vxpose.xlu0.b32.cont [6/16] 0, 128
    %203 = vxpose.xlu0.b32.cont [7/16] 0, 128
    %204 = vxpose.xlu0.b32.cont [8/16] 0, 128
    %205 = vxpose.xlu0.b32.cont [9/16] 0, 128
    %206 = vxpose.xlu0.b32.cont [10/16] 0, 128
    %207 = vxpose.xlu0.b32.cont [11/16] 0, 128
    %208 = vxpose.xlu0.b32.cont [12/16] 0, 128
    %209 = vxpose.xlu0.b32.cont [13/16] 0, 128
    %210 = vxpose.xlu0.b32.cont [14/16] 0, 128
    %211 = vxpose.xlu0.b32.cont [15/16] 0, 128
    %212 = vxpose.xlu0.b32.end [16/16] 0, 128
    %v213 = vpop.trf.xlu0
    %v214 = vpop.trf.xlu0
    %v215 = vpop.trf.xlu0
    %v216 = vpop.trf.xlu0
    %v217 = vpop.trf.xlu0
    %v218 = vpop.trf.xlu0
    %v219 = vpop.trf.xlu0
    %v220 = vpop.trf.xlu0
    %v221 = vpop.trf.xlu0
    %v222 = vpop.trf.xlu0
    %v223 = vpop.trf.xlu0
    %v224 = vpop.trf.xlu0
    %v225 = vpop.trf.xlu0
    %v226 = vpop.trf.xlu0
    %v227 = vpop.trf.xlu0
    %v228 = vpop.trf.xlu0
    %229 = vst [vmem:[#allocation5] sm:$0x1] %v213
    %s231 = sshllo.u32 0, 1
    %v233 = vld [vmem:[#allocation2] sm:%s231]
    %s234 = sshllo.u32 0, 1
    %235 = vst [vmem:[#allocation3] sm:%s234] %v233
    %s237 = sshllo.u32 0, 1
    %v239 = vld [vmem:[#allocation5] sm:%s237]
    %s240 = sshllo.u32 0, 1
    %241 = vst [vmem:[#allocation6] sm:%s240] %v239
    %p243 = scmp.gt.s32.totalorder 8, 0
    // Predicated region
    $region32: #{custom-call.8} parent=1 // pred_check
      %p244 = pneg %p243
    $region33: #{custom-call.8} parent=1 // pred_check_branch
      %246 = sbr.rel (%p244) target = $region35
    $region34: #{custom-call.8} parent=1 // pred_region
      %s247 = sshra.s32 8, 3
      %p248 = scmp.gt.s32.totalorder %s247, 0
      // Predicated region
      $region36: #{custom-call.8} parent=34 // pred_check
        %p249 = pneg %p248
      $region37: #{custom-call.8} parent=34 // pred_check_branch
        %251 = sbr.rel (%p249) target = $region39
      $region38: #{custom-call.8} parent=34 // pred_region
        %s252 = ssub.s32 %s247, 1
        %s253 = smul.u32 %s252, 128
        %s254 = sshra.s32 %s253, 4
        %s255 = scalar_lea.vmem [#allocation1], %s254
        %v256 = vld [vmem:[#allocation1] sm:$0xff]
        // While loop
        $region40: #{custom-call.8} parent=38 // loop_pre_header
          _
        $region41: #{custom-call.8} parent=38 // loop_header
          %s257 = sphi [#allocation1], %s279
          %s258 = sphi %s1, %s280
          %v259 = vphi %v256, %v281
          %s260 = ssub.s32 %s255, 64
          %p261 = scmp.gt.s32.totalorder %s257, %s260
        $region42: #{custom-call.8} parent=38 // loop_header_branch
          %263 = sbr.rel (%p261) target = $region46
        $region43: #{custom-call.8} parent=38 // loop_body
          %264 = vst [vmem:[%s258] sm:$0xff] %v259
          %v265 = vld [vmem:[%s257 + $0x8] sm:$0xff]
          %266 = vst [vmem:[%s258 + $0x8] sm:$0xff] %v265
          %v267 = vld [vmem:[%s257 + $0x10] sm:$0xff]
          %268 = vst [vmem:[%s258 + $0x10] sm:$0xff] %v267
          %v269 = vld [vmem:[%s257 + $0x18] sm:$0xff]
          %270 = vst [vmem:[%s258 + $0x18] sm:$0xff] %v269
          %v271 = vld [vmem:[%s257 + $0x20] sm:$0xff]
          %272 = vst [vmem:[%s258 + $0x20] sm:$0xff] %v271
          %v273 = vld [vmem:[%s257 + $0x28] sm:$0xff]
          %274 = vst [vmem:[%s258 + $0x28] sm:$0xff] %v273
          %v275 = vld [vmem:[%s257 + $0x30] sm:$0xff]
          %276 = vst [vmem:[%s258 + $0x30] sm:$0xff] %v275
          %v277 = vld [vmem:[%s257 + $0x38] sm:$0xff]
          %278 = vst [vmem:[%s258 + $0x38] sm:$0xff] %v277
        $region44: #{custom-call.8} parent=38 // loop_footer
          %s279 = scalar_lea.vmem %s257, 64
          %s280 = scalar_lea.vmem %s258, 64
          %v281 = vld [vmem:[%s257 + $0x40] sm:$0xff]
        $region45: #{custom-call.8} parent=38 // loop_footer_branch
          %282 = sbr.rel target = $region41
        $region46: #{custom-call.8} parent=38 // loop_exit
          _
        // While loop
        $region47: #{custom-call.8} parent=38 // loop_pre_header
          _
        $region48: #{custom-call.8} parent=38 // loop_header
          %s283 = sphi %s257, %s291
          %s284 = sphi %s258, %s292
          %v285 = vphi %v259, %v285
          %p286 = scmp.gt.s32.totalorder %s283, %s255
        $region49: #{custom-call.8} parent=38 // loop_header_branch
          %288 = sbr.rel (%p286) target = $region53
        $region50: #{custom-call.8} parent=38 // loop_body
          %v289 = vld [vmem:[%s283] sm:$0xff]
          %290 = vst [vmem:[%s284] sm:$0xff] %v289
        $region51: #{custom-call.8} parent=38 // loop_footer
          %s291 = scalar_lea.vmem %s283, 8
          %s292 = scalar_lea.vmem %s284, 8
        $region52: #{custom-call.8} parent=38 // loop_footer_branch
          %293 = sbr.rel target = $region48
        $region53: #{custom-call.8} parent=38 // loop_exit
          _
      $region39: #{custom-call.8} parent=34 // pred_fallthru
        _
      %s294 = sand.u32 8, 7
      %s295 = sshllo.u32 0, %s294
      %s296 = smul.u32 %s247, 128
      %s297 = sshra.s32 %s296, 4
      %s298 = scalar_lea.vmem %s1, %s297
      %s299 = smul.u32 %s247, 128
      %s300 = sshra.s32 %s299, 4
      %s301 = scalar_lea.vmem [#allocation1], %s300
      %v302 = vld [vmem:[%s301] sm:%s295]
      %303 = vst [vmem:[%s298] sm:%s295] %v302
    $region35: #{custom-call.8} parent=1 // pred_fallthru
      _
    // Predicated region
    $region54: #{custom-call.8} parent=1 // pred_check
      _
    $region55: #{custom-call.8} parent=1 // pred_check_branch
      %305 = sbr.rel (0) target = $region57
    $region56: #{custom-call.8} parent=1 // pred_region
      %s307 = ssub.s32 16, 16
      %308 = vsyncadd [#allocation4], %s307
      %s309 = sshll.u32 [#allocation3], 4
      %s310 = int_to_ptr.vmem [resolvable:$true] %s309
      %312 = dma.vmem_to_hbm [thread:$0]  %s310, 16, %s2, [#allocation4]
    $region57: #{custom-call.8} parent=1 // pred_fallthru
      _
    // Predicated region
    $region58: #{custom-call.8} parent=1 // pred_check
      _
    $region59: #{custom-call.8} parent=1 // pred_check_branch
      %314 = sbr.rel (0) target = $region61
    $region60: #{custom-call.8} parent=1 // pred_region
      %p316 = scmp.gt.s32.totalorder 1, 0
      // Predicated region
      $region62: #{custom-call.8} parent=60 // pred_check
        %p317 = pneg %p316
      $region63: #{custom-call.8} parent=60 // pred_check_branch
        %319 = sbr.rel (%p317) target = $region65
      $region64: #{custom-call.8} parent=60 // pred_region
        %s320 = sshra.s32 1, 3
        %p321 = scmp.gt.s32.totalorder %s320, 0
        // Predicated region
        $region66: #{custom-call.8} parent=64 // pred_check
          %p322 = pneg %p321
        $region67: #{custom-call.8} parent=64 // pred_check_branch
          %324 = sbr.rel (%p322) target = $region69
        $region68: #{custom-call.8} parent=64 // pred_region
          %s325 = ssub.s32 %s320, 1
          %s326 = smul.u32 %s325, 128
          %s327 = sshra.s32 %s326, 4
          %s328 = scalar_lea.vmem [#allocation6], %s327
          %v329 = vld [vmem:[#allocation6] sm:$0xff]
          // While loop
          $region70: #{custom-call.8} parent=68 // loop_pre_header
            _
          $region71: #{custom-call.8} parent=68 // loop_header
            %s330 = sphi [#allocation6], %s352
            %s331 = sphi %s3, %s353
            %v332 = vphi %v329, %v354
            %s333 = ssub.s32 %s328, 64
            %p334 = scmp.gt.s32.totalorder %s330, %s333
          $region72: #{custom-call.8} parent=68 // loop_header_branch
            %336 = sbr.rel (%p334) target = $region76
          $region73: #{custom-call.8} parent=68 // loop_body
            %337 = vst [vmem:[%s331] sm:$0xff] %v332
            %v338 = vld [vmem:[%s330 + $0x8] sm:$0xff]
            %339 = vst [vmem:[%s331 + $0x8] sm:$0xff] %v338
            %v340 = vld [vmem:[%s330 + $0x10] sm:$0xff]
            %341 = vst [vmem:[%s331 + $0x10] sm:$0xff] %v340
            %v342 = vld [vmem:[%s330 + $0x18] sm:$0xff]
            %343 = vst [vmem:[%s331 + $0x18] sm:$0xff] %v342
            %v344 = vld [vmem:[%s330 + $0x20] sm:$0xff]
            %345 = vst [vmem:[%s331 + $0x20] sm:$0xff] %v344
            %v346 = vld [vmem:[%s330 + $0x28] sm:$0xff]
            %347 = vst [vmem:[%s331 + $0x28] sm:$0xff] %v346
            %v348 = vld [vmem:[%s330 + $0x30] sm:$0xff]
            %349 = vst [vmem:[%s331 + $0x30] sm:$0xff] %v348
            %v350 = vld [vmem:[%s330 + $0x38] sm:$0xff]
            %351 = vst [vmem:[%s331 + $0x38] sm:$0xff] %v350
          $region74: #{custom-call.8} parent=68 // loop_footer
            %s352 = scalar_lea.vmem %s330, 64
            %s353 = scalar_lea.vmem %s331, 64
            %v354 = vld [vmem:[%s330 + $0x40] sm:$0xff]
          $region75: #{custom-call.8} parent=68 // loop_footer_branch
            %355 = sbr.rel target = $region71
          $region76: #{custom-call.8} parent=68 // loop_exit
            _
          // While loop
          $region77: #{custom-call.8} parent=68 // loop_pre_header
            _
          $region78: #{custom-call.8} parent=68 // loop_header
            %s356 = sphi %s330, %s364
            %s357 = sphi %s331, %s365
            %v358 = vphi %v332, %v358
            %p359 = scmp.gt.s32.totalorder %s356, %s328
          $region79: #{custom-call.8} parent=68 // loop_header_branch
            %361 = sbr.rel (%p359) target = $region83
          $region80: #{custom-call.8} parent=68 // loop_body
            %v362 = vld [vmem:[%s356] sm:$0xff]
            %363 = vst [vmem:[%s357] sm:$0xff] %v362
          $region81: #{custom-call.8} parent=68 // loop_footer
            %s364 = scalar_lea.vmem %s356, 8
            %s365 = scalar_lea.vmem %s357, 8
          $region82: #{custom-call.8} parent=68 // loop_footer_branch
            %366 = sbr.rel target = $region78
          $region83: #{custom-call.8} parent=68 // loop_exit
            _
        $region69: #{custom-call.8} parent=64 // pred_fallthru
          _
        %s367 = sand.u32 1, 7
        %s368 = sshllo.u32 0, %s367
        %s369 = smul.u32 %s320, 128
        %s370 = sshra.s32 %s369, 4
        %s371 = scalar_lea.vmem %s3, %s370
        %s372 = smul.u32 %s320, 128
        %s373 = sshra.s32 %s372, 4
        %s374 = scalar_lea.vmem [#allocation6], %s373
        %v375 = vld [vmem:[%s374] sm:%s368]
        %376 = vst [vmem:[%s371] sm:%s368] %v375
      $region65: #{custom-call.8} parent=60 // pred_fallthru
        _
    $region61: #{custom-call.8} parent=1 // pred_fallthru
      _
    // Predicated region
    $region84: #{custom-call.8} parent=1 // pred_check
      _
    $region85: #{custom-call.8} parent=1 // pred_check_branch
      %378 = sbr.rel (0) target = $region87
    $region86: #{custom-call.8} parent=1 // pred_region
      %379 = dma.done [#allocation4], 16
    $region87: #{custom-call.8} parent=1 // pred_fallthru
      _
    // Predicated region
    $region88: #{custom-call.8} parent=1 // pred_check
      _
    $region89: #{custom-call.8} parent=1 // pred_check_branch
      %381 = sbr.rel (0) target = $region91
    $region90: #{custom-call.8} parent=1 // pred_region
      _
    $region91: #{custom-call.8} parent=1 // pred_fallthru
      _
    %382 = vsyncpa [#allocation4], 1

// kernel: custom-call.9
$region0: #{custom-call.9}
  %s0 = inlined_call_operand.vmem [shape: f32[1,8,8], index: 0, kind: input, shape index: {}]
  %s1 = inlined_call_operand.vmem [shape: f32[1,8,8], index: 1, kind: output, shape index: {}]
  $region1: #{custom-call.9} parent=0
    #allocation0 [shape = 'u8[4096]{0}', space=vmem, size = 0x1000, scoped, tag = 'operand span for operand 0']
    #allocation1 [shape = 'u8[4096]{0}', space=vmem, size = 0x1000, scoped, tag = 'operand span for operand 1']
    #allocation2 [shape = 'f32[8,8]{1,0}', space=vmem, size = 0x1000, scoped, tag = 'rescaled input a']
    // Predicated region
    $region2: #{custom-call.9} parent=1 // pred_check
      _
    $region3: #{custom-call.9} parent=1 // pred_check_branch
      %3 = sbr.rel (0) target = $region5
    $region4: #{custom-call.9} parent=1 // pred_region
      // Predicated region
      $region6: #{custom-call.9} parent=4 // pred_check
        _
      $region7: #{custom-call.9} parent=4 // pred_check_branch
        %5 = sbr.rel (0) target = $region9
      $region8: #{custom-call.9} parent=4 // pred_region
        // Predicated region
        $region21: #{custom-call.9} parent=8 // pred_check
          _
        $region22: #{custom-call.9} parent=8 // pred_check_branch
          %20 = sbr.rel (0) target = $region24
        $region23: #{custom-call.9} parent=8 // pred_region
          loop: start=0, step=1, limit=1
          $region25: #{custom-call.9} parent=23 // loop_pre_header
            _
          $region26: #{custom-call.9} parent=23 // loop_header
            %s22 = sphi 0, %s26
            %p23 = scmp.ge.s32.totalorder %s22, 1
            %s27 = sphi %s0, %s0
            %s28 = sphi [#allocation0], [#allocation0]
          $region27: #{custom-call.9} parent=23 // loop_header_branch
            %25 = sbr.rel (%p23) target = $region31
          $region28: #{custom-call.9} parent=23 // loop_body
            %v29 = vld [vmem:[%s27] sm:$0xff]
            %30 = vst [vmem:[%s28] sm:$0xff] %v29
          $region29: #{custom-call.9} parent=23 // loop_footer
            %s26 = sadd.s32 1, %s22
          $region30: #{custom-call.9} parent=23 // loop_footer_branch
            %21 = sbr.rel target = $region26
          $region31: #{custom-call.9} parent=23 // loop_exit
            _
        $region24: #{custom-call.9} parent=8 // pred_fallthru
          _
        // Predicated region
        $region32: #{custom-call.9} parent=8 // pred_check
          _
        $region33: #{custom-call.9} parent=8 // pred_check_branch
          %32 = sbr.rel target = $region35
        $region34: #{custom-call.9} parent=8 // pred_region
          _
        $region35: #{custom-call.9} parent=8 // pred_fallthru
          _
      $region9: #{custom-call.9} parent=4 // pred_fallthru
        _
      // Predicated region
      $region10: #{custom-call.9} parent=4 // pred_check
        _
      $region11: #{custom-call.9} parent=4 // pred_check_branch
        %7 = sbr.rel target = $region13
      $region12: #{custom-call.9} parent=4 // pred_region
        loop: start=0, step=1, limit=1
        $region14: #{custom-call.9} parent=12 // loop_pre_header
          _
        $region15: #{custom-call.9} parent=12 // loop_header
          %s10 = sphi 0, %s14
          %p11 = scmp.ge.s32.totalorder %s10, 1
          %s15 = sphi %s0, %s0
          %s16 = sphi [#allocation0], [#allocation0]
        $region16: #{custom-call.9} parent=12 // loop_header_branch
          %13 = sbr.rel (%p11) target = $region20
        $region17: #{custom-call.9} parent=12 // loop_body
          %v17 = vld [vmem:[%s15] sm:$0xff]
          %18 = vst [vmem:[%s16] sm:$0xff] %v17
        $region18: #{custom-call.9} parent=12 // loop_footer
          %s14 = sadd.s32 1, %s10
        $region19: #{custom-call.9} parent=12 // loop_footer_branch
          %9 = sbr.rel target = $region15
        $region20: #{custom-call.9} parent=12 // loop_exit
          _
      $region13: #{custom-call.9} parent=4 // pred_fallthru
        _
    $region5: #{custom-call.9} parent=1 // pred_fallthru
      _
    %33 = vnop
    %v34 = vlaneseq
    %v35 = vand.u32 %v34, 127
    %vm36 = vcmp.lt.s32.totalorder %v35, 8
    %v37 = vlaneseq
    %v38 = vshrl.u32 %v37, 7
    %vm40 = vcmp.eq.s32.totalorder %v38, %v35
    %v41 = vld [vmem:[#allocation0] sm:$0xff]
    %v42 = vsel %vm40, %v41, 0.0
    %43 = vadd.xlane.f32.xlu0 %v42
    %v44 = vpop.xlane.xlu0 %43
    %vm45 = vcmp.le.s32.totalorder %v38, %v35
    %vm46 = vmand %vm45, %vm36
    %v47 = vsel %vm46, %v41, 0.0
    %v48 = vrcp.pop %v44
    %v49 = vmul.f32 %v47, %v48
    %50 = vst [vmem:[#allocation2] sm:$0xff] %v49
    %v51 = vlaneseq
    %v52 = vand.u32 %v51, 127
    %v53 = vlaneseq
    %v54 = vshrl.u32 %v53, 7
    %vm56 = vcmp.eq.s32.totalorder %v52, %v54
    %v57 = vlaneseq
    %v58 = vand.u32 %v57, 127
    %vm59 = vcmp.eq.s32.totalorder %v58, 7
    %v60 = vsel %vm59, 1.0, -1.0
    %v61 = vsel %vm56, %v60, 0.0
    %s62 = scalar_lea.vmem [#allocation2], 6
    %v63 = vld [vmem:[%s62] ss:$0 sm:$0xff]
    %v64 = vxor.u32 %v63, 2147483648
    %v65 = vlaneseq
    %v66 = vand.u32 %v65, 127
    %vm67 = vcmp.eq.s32.totalorder %v66, 6
    %v68 = vmul.f32 %v64, %v61
    %69 = vadd.xlane.f32.xlu0 %v68
    %v70 = vpop.xlane.xlu0 %69
    %v71 = vsel %vm67, %v70, %v61
    %s72 = scalar_lea.vmem [#allocation2], 5
    %v73 = vld [vmem:[%s72] ss:$0 sm:$0xff]
    %v74 = vxor.u32 %v73, 2147483648
    %v75 = vlaneseq
    %v76 = vand.u32 %v75, 127
    %vm77 = vcmp.eq.s32.totalorder %v76, 5
    %v78 = vmul.f32 %v74, %v71
    %79 = vadd.xlane.f32.xlu0 %v78
    %v80 = vpop.xlane.xlu0 %79
    %v81 = vsel %vm77, %v80, %v71
    %s82 = scalar_lea.vmem [#allocation2], 4
    %v83 = vld [vmem:[%s82] ss:$0 sm:$0xff]
    %v84 = vxor.u32 %v83, 2147483648
    %v85 = vlaneseq
    %v86 = vand.u32 %v85, 127
    %vm87 = vcmp.eq.s32.totalorder %v86, 4
    %v88 = vmul.f32 %v84, %v81
    %89 = vadd.xlane.f32.xlu0 %v88
    %v90 = vpop.xlane.xlu0 %89
    %v91 = vsel %vm87, %v90, %v81
    %s92 = scalar_lea.vmem [#allocation2], 3
    %v93 = vld [vmem:[%s92] ss:$0 sm:$0xff]
    %v94 = vxor.u32 %v93, 2147483648
    %v95 = vlaneseq
    %v96 = vand.u32 %v95, 127
    %vm97 = vcmp.eq.s32.totalorder %v96, 3
    %v98 = vmul.f32 %v94, %v91
    %99 = vadd.xlane.f32.xlu0 %v98
    %v100 = vpop.xlane.xlu0 %99
    %v101 = vsel %vm97, %v100, %v91
    %s102 = scalar_lea.vmem [#allocation2], 2
    %v103 = vld [vmem:[%s102] ss:$0 sm:$0xff]
    %v104 = vxor.u32 %v103, 2147483648
    %v105 = vlaneseq
    %v106 = vand.u32 %v105, 127
    %vm107 = vcmp.eq.s32.totalorder %v106, 2
    %v108 = vmul.f32 %v104, %v101
    %109 = vadd.xlane.f32.xlu0 %v108
    %v110 = vpop.xlane.xlu0 %109
    %v111 = vsel %vm107, %v110, %v101
    %s112 = scalar_lea.vmem [#allocation2], 1
    %v113 = vld [vmem:[%s112] ss:$0 sm:$0xff]
    %v114 = vxor.u32 %v113, 2147483648
    %v115 = vlaneseq
    %v116 = vand.u32 %v115, 127
    %vm117 = vcmp.eq.s32.totalorder %v116, 1
    %v118 = vmul.f32 %v114, %v111
    %119 = vadd.xlane.f32.xlu0 %v118
    %v120 = vpop.xlane.xlu0 %119
    %v121 = vsel %vm117, %v120, %v111
    %v122 = vld [vmem:[#allocation2] ss:$0 sm:$0xff]
    %v123 = vxor.u32 %v122, 2147483648
    %v124 = vlaneseq
    %v125 = vand.u32 %v124, 127
    %vm126 = vcmp.eq.s32.totalorder %v125, 0
    %v127 = vmul.f32 %v123, %v121
    %128 = vadd.xlane.f32.xlu0 %v127
    %v129 = vpop.xlane.xlu0 %128
    %v130 = vsel %vm126, %v129, %v121
    %v131 = vrcp.pop %v44
    %v132 = vmul.f32 %v130, %v131
    %vm133 = vweird.f32 %v44
    %v134 = vsel %vm133, %v130, %v132
    %135 = vst [vmem:[#allocation1] sm:$0xff] %v134
    // Predicated region
    $region36: #{custom-call.9} parent=1 // pred_check
      _
    $region37: #{custom-call.9} parent=1 // pred_check_branch
      %137 = sbr.rel (0) target = $region39
    $region38: #{custom-call.9} parent=1 // pred_region
      // Predicated region
      $region40: #{custom-call.9} parent=38 // pred_check
        _
      $region41: #{custom-call.9} parent=38 // pred_check_branch
        %139 = sbr.rel (0) target = $region43
      $region42: #{custom-call.9} parent=38 // pred_region
        // Predicated region
        $region55: #{custom-call.9} parent=42 // pred_check
          _
        $region56: #{custom-call.9} parent=42 // pred_check_branch
          %154 = sbr.rel (0) target = $region58
        $region57: #{custom-call.9} parent=42 // pred_region
          loop: start=0, step=1, limit=1
          $region59: #{custom-call.9} parent=57 // loop_pre_header
            _
          $region60: #{custom-call.9} parent=57 // loop_header
            %s156 = sphi 0, %s160
            %p157 = scmp.ge.s32.totalorder %s156, 1
            %s161 = sphi [#allocation1], [#allocation1]
            %s162 = sphi %s1, %s1
          $region61: #{custom-call.9} parent=57 // loop_header_branch
            %159 = sbr.rel (%p157) target = $region65
          $region62: #{custom-call.9} parent=57 // loop_body
            %v163 = vld [vmem:[%s161] sm:$0xff]
            %164 = vst [vmem:[%s162] sm:$0xff] %v163
          $region63: #{custom-call.9} parent=57 // loop_footer
            %s160 = sadd.s32 1, %s156
          $region64: #{custom-call.9} parent=57 // loop_footer_branch
            %155 = sbr.rel target = $region60
          $region65: #{custom-call.9} parent=57 // loop_exit
            _
        $region58: #{custom-call.9} parent=42 // pred_fallthru
          _
        // Predicated region
        $region66: #{custom-call.9} parent=42 // pred_check
          _
        $region67: #{custom-call.9} parent=42 // pred_check_branch
          %166 = sbr.rel target = $region69
        $region68: #{custom-call.9} parent=42 // pred_region
          _
        $region69: #{custom-call.9} parent=42 // pred_fallthru
          _
      $region43: #{custom-call.9} parent=38 // pred_fallthru
        _
      // Predicated region
      $region44: #{custom-call.9} parent=38 // pred_check
        _
      $region45: #{custom-call.9} parent=38 // pred_check_branch
        %141 = sbr.rel target = $region47
      $region46: #{custom-call.9} parent=38 // pred_region
        loop: start=0, step=1, limit=1
        $region48: #{custom-call.9} parent=46 // loop_pre_header
          _
        $region49: #{custom-call.9} parent=46 // loop_header
          %s144 = sphi 0, %s148
          %p145 = scmp.ge.s32.totalorder %s144, 1
          %s149 = sphi [#allocation1], [#allocation1]
          %s150 = sphi %s1, %s1
        $region50: #{custom-call.9} parent=46 // loop_header_branch
          %147 = sbr.rel (%p145) target = $region54
        $region51: #{custom-call.9} parent=46 // loop_body
          %v151 = vld [vmem:[%s149] sm:$0xff]
          %152 = vst [vmem:[%s150] sm:$0xff] %v151
        $region52: #{custom-call.9} parent=46 // loop_footer
          %s148 = sadd.s32 1, %s144
        $region53: #{custom-call.9} parent=46 // loop_footer_branch
          %143 = sbr.rel target = $region49
        $region54: #{custom-call.9} parent=46 // loop_exit
          _
      $region47: #{custom-call.9} parent=38 // pred_fallthru
        _
    $region39: #{custom-call.9} parent=1 // pred_fallthru
      _
    %167 = vnop

// kernel: custom-call.10
$region0: #{custom-call.10}
  %s0 = inlined_call_operand.vmem [shape: f32[1,8,8], index: 0, kind: input, shape index: {}]
  %s1 = inlined_call_operand.vmem [shape: f32[1,8,8], index: 1, kind: output, shape index: {}]
  $region1: #{custom-call.10} parent=0
    #allocation0 [shape = 'u8[4096]{0}', space=vmem, size = 0x1000, scoped, tag = 'operand span for operand 0']
    #allocation1 [shape = 'u8[4096]{0}', space=vmem, size = 0x1000, scoped, tag = 'operand span for operand 1']
    #allocation2 [shape = 'f32[8,8]{1,0}', space=vmem, size = 0x1000, scoped, tag = 'rescaled input a']
    // Predicated region
    $region2: #{custom-call.10} parent=1 // pred_check
      _
    $region3: #{custom-call.10} parent=1 // pred_check_branch
      %3 = sbr.rel (0) target = $region5
    $region4: #{custom-call.10} parent=1 // pred_region
      // Predicated region
      $region6: #{custom-call.10} parent=4 // pred_check
        _
      $region7: #{custom-call.10} parent=4 // pred_check_branch
        %5 = sbr.rel (0) target = $region9
      $region8: #{custom-call.10} parent=4 // pred_region
        // Predicated region
        $region21: #{custom-call.10} parent=8 // pred_check
          _
        $region22: #{custom-call.10} parent=8 // pred_check_branch
          %20 = sbr.rel (0) target = $region24
        $region23: #{custom-call.10} parent=8 // pred_region
          loop: start=0, step=1, limit=1
          $region25: #{custom-call.10} parent=23 // loop_pre_header
            _
          $region26: #{custom-call.10} parent=23 // loop_header
            %s22 = sphi 0, %s26
            %p23 = scmp.ge.s32.totalorder %s22, 1
            %s27 = sphi %s0, %s0
            %s28 = sphi [#allocation0], [#allocation0]
          $region27: #{custom-call.10} parent=23 // loop_header_branch
            %25 = sbr.rel (%p23) target = $region31
          $region28: #{custom-call.10} parent=23 // loop_body
            %v29 = vld [vmem:[%s27] sm:$0xff]
            %30 = vst [vmem:[%s28] sm:$0xff] %v29
          $region29: #{custom-call.10} parent=23 // loop_footer
            %s26 = sadd.s32 1, %s22
          $region30: #{custom-call.10} parent=23 // loop_footer_branch
            %21 = sbr.rel target = $region26
          $region31: #{custom-call.10} parent=23 // loop_exit
            _
        $region24: #{custom-call.10} parent=8 // pred_fallthru
          _
        // Predicated region
        $region32: #{custom-call.10} parent=8 // pred_check
          _
        $region33: #{custom-call.10} parent=8 // pred_check_branch
          %32 = sbr.rel target = $region35
        $region34: #{custom-call.10} parent=8 // pred_region
          _
        $region35: #{custom-call.10} parent=8 // pred_fallthru
          _
      $region9: #{custom-call.10} parent=4 // pred_fallthru
        _
      // Predicated region
      $region10: #{custom-call.10} parent=4 // pred_check
        _
      $region11: #{custom-call.10} parent=4 // pred_check_branch
        %7 = sbr.rel target = $region13
      $region12: #{custom-call.10} parent=4 // pred_region
        loop: start=0, step=1, limit=1
        $region14: #{custom-call.10} parent=12 // loop_pre_header
          _
        $region15: #{custom-call.10} parent=12 // loop_header
          %s10 = sphi 0, %s14
          %p11 = scmp.ge.s32.totalorder %s10, 1
          %s15 = sphi %s0, %s0
          %s16 = sphi [#allocation0], [#allocation0]
        $region16: #{custom-call.10} parent=12 // loop_header_branch
          %13 = sbr.rel (%p11) target = $region20
        $region17: #{custom-call.10} parent=12 // loop_body
          %v17 = vld [vmem:[%s15] sm:$0xff]
          %18 = vst [vmem:[%s16] sm:$0xff] %v17
        $region18: #{custom-call.10} parent=12 // loop_footer
          %s14 = sadd.s32 1, %s10
        $region19: #{custom-call.10} parent=12 // loop_footer_branch
          %9 = sbr.rel target = $region15
        $region20: #{custom-call.10} parent=12 // loop_exit
          _
      $region13: #{custom-call.10} parent=4 // pred_fallthru
        _
    $region5: #{custom-call.10} parent=1 // pred_fallthru
      _
    %33 = vnop
    %v34 = vlaneseq
    %v35 = vand.u32 %v34, 127
    %vm36 = vcmp.lt.s32.totalorder %v35, 8
    %v37 = vlaneseq
    %v38 = vshrl.u32 %v37, 7
    %vm40 = vcmp.eq.s32.totalorder %v38, %v35
    %v41 = vld [vmem:[#allocation0] sm:$0xff]
    %v42 = vsel %vm40, %v41, 0.0
    %43 = vadd.xlane.f32.xlu0 %v42
    %v44 = vpop.xlane.xlu0 %43
    %vm45 = vcmp.ge.s32.totalorder %v38, %v35
    %vm46 = vmand %vm45, %vm36
    %v47 = vsel %vm46, %v41, 0.0
    %v48 = vrcp.pop %v44
    %v49 = vmul.f32 %v47, %v48
    %50 = vst [vmem:[#allocation2] sm:$0xff] %v49
    %v51 = vlaneseq
    %v52 = vand.u32 %v51, 127
    %v53 = vlaneseq
    %v54 = vshrl.u32 %v53, 7
    %vm56 = vcmp.eq.s32.totalorder %v52, %v54
    %v57 = vlaneseq
    %v58 = vand.u32 %v57, 127
    %vm59 = vcmp.eq.s32.totalorder %v58, 0
    %v60 = vsel %vm59, 1.0, -1.0
    %v61 = vsel %vm56, %v60, 0.0
    %s62 = scalar_lea.vmem [#allocation2], 1
    %v63 = vld [vmem:[%s62] ss:$0 sm:$0xff]
    %v64 = vxor.u32 %v63, 2147483648
    %v65 = vlaneseq
    %v66 = vand.u32 %v65, 127
    %vm67 = vcmp.eq.s32.totalorder %v66, 1
    %v68 = vmul.f32 %v64, %v61
    %69 = vadd.xlane.f32.xlu0 %v68
    %v70 = vpop.xlane.xlu0 %69
    %v71 = vsel %vm67, %v70, %v61
    %s72 = scalar_lea.vmem [#allocation2], 2
    %v73 = vld [vmem:[%s72] ss:$0 sm:$0xff]
    %v74 = vxor.u32 %v73, 2147483648
    %v75 = vlaneseq
    %v76 = vand.u32 %v75, 127
    %vm77 = vcmp.eq.s32.totalorder %v76, 2
    %v78 = vmul.f32 %v74, %v71
    %79 = vadd.xlane.f32.xlu0 %v78
    %v80 = vpop.xlane.xlu0 %79
    %v81 = vsel %vm77, %v80, %v71
    %s82 = scalar_lea.vmem [#allocation2], 3
    %v83 = vld [vmem:[%s82] ss:$0 sm:$0xff]
    %v84 = vxor.u32 %v83, 2147483648
    %v85 = vlaneseq
    %v86 = vand.u32 %v85, 127
    %vm87 = vcmp.eq.s32.totalorder %v86, 3
    %v88 = vmul.f32 %v84, %v81
    %89 = vadd.xlane.f32.xlu0 %v88
    %v90 = vpop.xlane.xlu0 %89
    %v91 = vsel %vm87, %v90, %v81
    %s92 = scalar_lea.vmem [#allocation2], 4
    %v93 = vld [vmem:[%s92] ss:$0 sm:$0xff]
    %v94 = vxor.u32 %v93, 2147483648
    %v95 = vlaneseq
    %v96 = vand.u32 %v95, 127
    %vm97 = vcmp.eq.s32.totalorder %v96, 4
    %v98 = vmul.f32 %v94, %v91
    %99 = vadd.xlane.f32.xlu0 %v98
    %v100 = vpop.xlane.xlu0 %99
    %v101 = vsel %vm97, %v100, %v91
    %s102 = scalar_lea.vmem [#allocation2], 5
    %v103 = vld [vmem:[%s102] ss:$0 sm:$0xff]
    %v104 = vxor.u32 %v103, 2147483648
    %v105 = vlaneseq
    %v106 = vand.u32 %v105, 127
    %vm107 = vcmp.eq.s32.totalorder %v106, 5
    %v108 = vmul.f32 %v104, %v101
    %109 = vadd.xlane.f32.xlu0 %v108
    %v110 = vpop.xlane.xlu0 %109
    %v111 = vsel %vm107, %v110, %v101
    %s112 = scalar_lea.vmem [#allocation2], 6
    %v113 = vld [vmem:[%s112] ss:$0 sm:$0xff]
    %v114 = vxor.u32 %v113, 2147483648
    %v115 = vlaneseq
    %v116 = vand.u32 %v115, 127
    %vm117 = vcmp.eq.s32.totalorder %v116, 6
    %v118 = vmul.f32 %v114, %v111
    %119 = vadd.xlane.f32.xlu0 %v118
    %v120 = vpop.xlane.xlu0 %119
    %v121 = vsel %vm117, %v120, %v111
    %s122 = scalar_lea.vmem [#allocation2], 7
    %v123 = vld [vmem:[%s122] ss:$0 sm:$0xff]
    %v124 = vxor.u32 %v123, 2147483648
    %v125 = vlaneseq
    %v126 = vand.u32 %v125, 127
    %vm127 = vcmp.eq.s32.totalorder %v126, 7
    %v128 = vmul.f32 %v124, %v121
    %129 = vadd.xlane.f32.xlu0 %v128
    %v130 = vpop.xlane.xlu0 %129
    %v131 = vsel %vm127, %v130, %v121
    %v132 = vrcp.pop %v44
    %v133 = vmul.f32 %v131, %v132
    %vm134 = vweird.f32 %v44
    %v135 = vsel %vm134, %v131, %v133
    %136 = vst [vmem:[#allocation1] sm:$0xff] %v135
    // Predicated region
    $region36: #{custom-call.10} parent=1 // pred_check
      _
    $region37: #{custom-call.10} parent=1 // pred_check_branch
      %138 = sbr.rel (0) target = $region39
    $region38: #{custom-call.10} parent=1 // pred_region
      // Predicated region
      $region40: #{custom-call.10} parent=38 // pred_check
        _
      $region41: #{custom-call.10} parent=38 // pred_check_branch
        %140 = sbr.rel (0) target = $region43
      $region42: #{custom-call.10} parent=38 // pred_region
        // Predicated region
        $region55: #{custom-call.10} parent=42 // pred_check
          _
        $region56: #{custom-call.10} parent=42 // pred_check_branch
          %155 = sbr.rel (0) target = $region58
        $region57: #{custom-call.10} parent=42 // pred_region
          loop: start=0, step=1, limit=1
          $region59: #{custom-call.10} parent=57 // loop_pre_header
            _
          $region60: #{custom-call.10} parent=57 // loop_header
            %s157 = sphi 0, %s161
            %p158 = scmp.ge.s32.totalorder %s157, 1
            %s162 = sphi [#allocation1], [#allocation1]
            %s163 = sphi %s1, %s1
          $region61: #{custom-call.10} parent=57 // loop_header_branch
            %160 = sbr.rel (%p158) target = $region65
          $region62: #{custom-call.10} parent=57 // loop_body
            %v164 = vld [vmem:[%s162] sm:$0xff]
            %165 = vst [vmem:[%s163] sm:$0xff] %v164
          $region63: #{custom-call.10} parent=57 // loop_footer
            %s161 = sadd.s32 1, %s157
          $region64: #{custom-call.10} parent=57 // loop_footer_branch
            %156 = sbr.rel target = $region60
          $region65: #{custom-call.10} parent=57 // loop_exit
            _
        $region58: #{custom-call.10} parent=42 // pred_fallthru
          _
        // Predicated region
        $region66: #{custom-call.10} parent=42 // pred_check
          _
        $region67: #{custom-call.10} parent=42 // pred_check_branch
          %167 = sbr.rel target = $region69
        $region68: #{custom-call.10} parent=42 // pred_region
          _
        $region69: #{custom-call.10} parent=42 // pred_fallthru
          _
      $region43: #{custom-call.10} parent=38 // pred_fallthru
        _
      // Predicated region
      $region44: #{custom-call.10} parent=38 // pred_check
        _
      $region45: #{custom-call.10} parent=38 // pred_check_branch
        %142 = sbr.rel target = $region47
      $region46: #{custom-call.10} parent=38 // pred_region
        loop: start=0, step=1, limit=1
        $region48: #{custom-call.10} parent=46 // loop_pre_header
          _
        $region49: #{custom-call.10} parent=46 // loop_header
          %s145 = sphi 0, %s149
          %p146 = scmp.ge.s32.totalorder %s145, 1
          %s150 = sphi [#allocation1], [#allocation1]
          %s151 = sphi %s1, %s1
        $region50: #{custom-call.10} parent=46 // loop_header_branch
          %148 = sbr.rel (%p146) target = $region54
        $region51: #{custom-call.10} parent=46 // loop_body
          %v152 = vld [vmem:[%s150] sm:$0xff]
          %153 = vst [vmem:[%s151] sm:$0xff] %v152
        $region52: #{custom-call.10} parent=46 // loop_footer
          %s149 = sadd.s32 1, %s145
        $region53: #{custom-call.10} parent=46 // loop_footer_branch
          %144 = sbr.rel target = $region49
        $region54: #{custom-call.10} parent=46 // loop_exit
          _
      $region47: #{custom-call.10} parent=38 // pred_fallthru
        _
    $region39: #{custom-call.10} parent=1 // pred_fallthru
      _
    %168 = vnop

// kernel: _decoder_forward.1
$region0: #{_decoder_forward.1}
  #allocation0 [shape = 'u32[]', space=smem, size = 0x4, offset = 0x4, fixed_abs, tag = 'smem constant byte address 0x4 - core index']
  #allocation1 [shape = 'u32[144,128]{1,0:T(1,128)}', space=vmem, size = 0x12000, scoped, tag = 'internal scratch']
  %s0 = inlined_call_operand.vmem [shape: f32[8,8], index: 0, kind: input, shape index: {}]
  %s1 = inlined_call_operand.vmem [shape: f32[2,8,16], index: 1, kind: input, shape index: {}]
  %s2 = inlined_call_operand.vmem [shape: f32[1,64], index: 2, kind: input, shape index: {}]
  %s3 = inlined_call_operand.vmem [shape: f32[16,32], index: 3, kind: input, shape index: {}]
  %s4 = inlined_call_operand.vmem [shape: f32[32,16], index: 4, kind: input, shape index: {}]
  %s5 = inlined_call_operand.vmem [shape: f32[16,32], index: 5, kind: output, shape index: {}]
  %s6 = sld [smem:[#allocation0]]
  $region30: #{_decoder_forward.1} parent=0
    _
  %s8 = ssub.s32 1, %s6
  %s9 = scalar_select 0, %s8, %s6
  // Predicated region
  $region2: #{_decoder_forward.1} parent=0 // pred_check
    _
  $region3: #{_decoder_forward.1} parent=0 // pred_check_branch
    %11 = sbr.rel (0) target = $region5
  $region4: #{_decoder_forward.1} parent=0 // pred_region
    _
  $region5: #{_decoder_forward.1} parent=0 // pred_fallthru
    _
  // Predicated region
  $region6: #{_decoder_forward.1} parent=0 // pred_check
    _
  $region7: #{_decoder_forward.1} parent=0 // pred_check_branch
    %13 = sbr.rel (0) target = $region9
  $region8: #{_decoder_forward.1} parent=0 // pred_region
    _
  $region9: #{_decoder_forward.1} parent=0 // pred_fallthru
    _
  // Predicated region
  $region10: #{_decoder_forward.1} parent=0 // pred_check
    _
  $region11: #{_decoder_forward.1} parent=0 // pred_check_branch
    %15 = sbr.rel (0) target = $region13
  $region12: #{_decoder_forward.1} parent=0 // pred_region
    _
  $region13: #{_decoder_forward.1} parent=0 // pred_fallthru
    _
  // Predicated region
  $region14: #{_decoder_forward.1} parent=0 // pred_check
    _
  $region15: #{_decoder_forward.1} parent=0 // pred_check_branch
    %17 = sbr.rel (0) target = $region17
  $region16: #{_decoder_forward.1} parent=0 // pred_region
    _
  $region17: #{_decoder_forward.1} parent=0 // pred_fallthru
    _
  // Predicated region
  $region18: #{_decoder_forward.1} parent=0 // pred_check
    _
  $region19: #{_decoder_forward.1} parent=0 // pred_check_branch
    %19 = sbr.rel (0) target = $region21
  $region20: #{_decoder_forward.1} parent=0 // pred_region
    _
  $region21: #{_decoder_forward.1} parent=0 // pred_fallthru
    _
  %v20 = vld [vmem:[%s2] sm:$0x1]
  %v21 = vld [vmem:[%s1] sm:$0xff]
  %v22 = vld [vmem:[%s1 + $0x8] sm:$0xff]
  %v24 = vlaneseq
  %v25 = vshrl.u32 %v24, 7
  %v26 = vsub.s32 0, %v25
  %v27 = vrot.slane %v20, %v26
  %v29 = vadd.f32 %v21, %v27
  %v30 = vadd.f32 %v22, %v27
  %v31 = vld [vmem:[%s0] sm:$0xff]
  %vm32 = vcmask 64512
  %v34 = vsel %vm32, %v31, 0
  %36 = vmatprep.subr.mxu0 0.0
  %37 = vmatpush1.msra.mxu0 %v29
  %38 = vmatprep.subr.mxu0 0.0
  %39 = vmatpush1.msra.mxu0 0.0
  %40 = vmatprep.subr.mxu0 0.0
  %41 = vmatpush1.msra.mxu0 0.0
  %42 = vmatprep.subr.mxu0 0.0
  %43 = vmatpush1.msra.mxu0 0.0
  %44 = vmatprep.subr.mxu0 0.0
  %45 = vmatpush1.msra.mxu0 0.0
  %46 = vmatprep.subr.mxu0 0.0
  %47 = vmatpush1.msra.mxu0 0.0
  %48 = vmatprep.subr.mxu0 0.0
  %49 = vmatpush1.msra.mxu0 0.0
  %50 = vmatprep.subr.mxu0 0.0
  %51 = vmatpush1.msra.mxu0 0.0
  %52 = vmatprep.subr.mxu0 0.0
  %53 = vmatpush1.msra.mxu0 0.0
  %54 = vmatprep.subr.mxu0 0.0
  %55 = vmatpush1.msra.mxu0 0.0
  %56 = vmatprep.subr.mxu0 0.0
  %57 = vmatpush1.msra.mxu0 0.0
  %58 = vmatprep.subr.mxu0 0.0
  %59 = vmatpush1.msra.mxu0 0.0
  %60 = vmatprep.subr.mxu0 0.0
  %61 = vmatpush1.msra.mxu0 0.0
  %62 = vmatprep.subr.mxu0 0.0
  %63 = vmatpush1.msra.mxu0 0.0
  %64 = vmatprep.subr.mxu0 0.0
  %65 = vmatpush1.msra.mxu0 0.0
  %66 = vmatprep.subr.mxu0 0.0
  %67 = vmatpush1.msra.mxu0 0.0
  %68 = vmatprep.subr.mxu0 0.0
  %69 = vmatpush1.msra.mxu0 0.0
  %70 = vmatprep.subr.mxu0 0.0
  %71 = vmatpush1.msra.mxu0 0.0
  %72 = vmatprep.subr.mxu0 0.0
  %73 = vmatpush1.msra.mxu0 0.0
  %74 = vmatprep.subr.mxu0 0.0
  %75 = vmatpush1.msra.mxu0 0.0
  %76 = vmatprep.subr.mxu0 0.0
  %77 = vmatpush1.msra.mxu0 0.0
  %78 = vmatprep.subr.mxu0 0.0
  %79 = vmatpush1.msra.mxu0 0.0
  %80 = vmatprep.subr.mxu0 0.0
  %81 = vmatpush1.msra.mxu0 0.0
  %82 = vmatprep.subr.mxu0 0.0
  %83 = vmatpush1.msra.mxu0 0.0
  %84 = vmatprep.subr.mxu0 0.0
  %85 = vmatpush1.msra.mxu0 0.0
  %86 = vmatprep.subr.mxu0 0.0
  %87 = vmatpush1.msra.mxu0 0.0
  %88 = vmatprep.subr.mxu0 0.0
  %89 = vmatpush1.msra.mxu0 0.0
  %90 = vmatprep.subr.mxu0 0.0
  %91 = vmatpush1.msra.mxu0 0.0
  %92 = vmatprep.subr.mxu0 0.0
  %93 = vmatpush1.msra.mxu0 0.0
  %94 = vmatprep.subr.mxu0 0.0
  %95 = vmatpush1.msra.mxu0 0.0
  %96 = vmatprep.subr.mxu0 0.0
  %97 = vmatpush1.msra.mxu0 0.0
  %98 = vmatprep.subr.mxu0 0.0
  %99 = vmatpush1.msra.mxu0 0.0
  %100 = vmatprep.mubr.f32.mxu0 0.0
  %101 = vmatmul.mubr.f32.gmra.mrb[0].mxu0 %v34
  %v102 = vpop.f32.mrb[0].mxu0
  %v103 = vadd.f32 0.0, %v102
  %v104 = vpop.f32.mrb[0].mxu0
  %105 = vdwg.mxu0
  %106 = vmatprep.subr.mxu0 0.0
  %107 = vmatpush1.msra.mxu0 %v30
  %108 = vmatprep.subr.mxu0 0.0
  %109 = vmatpush1.msra.mxu0 0.0
  %110 = vmatprep.subr.mxu0 0.0
  %111 = vmatpush1.msra.mxu0 0.0
  %112 = vmatprep.subr.mxu0 0.0
  %113 = vmatpush1.msra.mxu0 0.0
  %114 = vmatprep.subr.mxu0 0.0
  %115 = vmatpush1.msra.mxu0 0.0
  %116 = vmatprep.subr.mxu0 0.0
  %117 = vmatpush1.msra.mxu0 0.0
  %118 = vmatprep.subr.mxu0 0.0
  %119 = vmatpush1.msra.mxu0 0.0
  %120 = vmatprep.subr.mxu0 0.0
  %121 = vmatpush1.msra.mxu0 0.0
  %122 = vmatprep.subr.mxu0 0.0
  %123 = vmatpush1.msra.mxu0 0.0
  %124 = vmatprep.subr.mxu0 0.0
  %125 = vmatpush1.msra.mxu0 0.0
  %126 = vmatprep.subr.mxu0 0.0
  %127 = vmatpush1.msra.mxu0 0.0
  %128 = vmatprep.subr.mxu0 0.0
  %129 = vmatpush1.msra.mxu0 0.0
  %130 = vmatprep.subr.mxu0 0.0
  %131 = vmatpush1.msra.mxu0 0.0
  %132 = vmatprep.subr.mxu0 0.0
  %133 = vmatpush1.msra.mxu0 0.0
  %134 = vmatprep.subr.mxu0 0.0
  %135 = vmatpush1.msra.mxu0 0.0
  %136 = vmatprep.subr.mxu0 0.0
  %137 = vmatpush1.msra.mxu0 0.0
  %138 = vmatprep.subr.mxu0 0.0
  %139 = vmatpush1.msra.mxu0 0.0
  %140 = vmatprep.subr.mxu0 0.0
  %141 = vmatpush1.msra.mxu0 0.0
  %142 = vmatprep.subr.mxu0 0.0
  %143 = vmatpush1.msra.mxu0 0.0
  %144 = vmatprep.subr.mxu0 0.0
  %145 = vmatpush1.msra.mxu0 0.0
  %146 = vmatprep.subr.mxu0 0.0
  %147 = vmatpush1.msra.mxu0 0.0
  %148 = vmatprep.subr.mxu0 0.0
  %149 = vmatpush1.msra.mxu0 0.0
  %150 = vmatprep.subr.mxu0 0.0
  %151 = vmatpush1.msra.mxu0 0.0
  %152 = vmatprep.subr.mxu0 0.0
  %153 = vmatpush1.msra.mxu0 0.0
  %154 = vmatprep.subr.mxu0 0.0
  %155 = vmatpush1.msra.mxu0 0.0
  %156 = vmatprep.subr.mxu0 0.0
  %157 = vmatpush1.msra.mxu0 0.0
  %158 = vmatprep.subr.mxu0 0.0
  %159 = vmatpush1.msra.mxu0 0.0
  %160 = vmatprep.subr.mxu0 0.0
  %161 = vmatpush1.msra.mxu0 0.0
  %162 = vmatprep.subr.mxu0 0.0
  %163 = vmatpush1.msra.mxu0 0.0
  %164 = vmatprep.subr.mxu0 0.0
  %165 = vmatpush1.msra.mxu0 0.0
  %166 = vmatprep.subr.mxu0 0.0
  %167 = vmatpush1.msra.mxu0 0.0
  %168 = vmatprep.subr.mxu0 0.0
  %169 = vmatpush1.msra.mxu0 0.0
  %170 = vmatprep.mubr.f32.mxu0 0.0
  %171 = vmatmul.mubr.f32.gmra.mrb[0].mxu0 %v34
  %v172 = vpop.f32.mrb[0].mxu0
  %v173 = vadd.f32 0.0, %v172
  %v174 = vpop.f32.mrb[0].mxu0
  %175 = vdwg.mxu0
  %v176 = vsub.f32 %v103, %v27
  %v177 = vsub.f32 %v173, %v27
  %v178 = vld [vmem:[%s3] sm:$0xff]
  %v179 = vld [vmem:[%s3 + $0x8] sm:$0xff]
  %180 = vrot.lane.b32.xlu0 %v27, 112
  %v181 = vpop.permute.xlu0 %180
  %vm183 = vcmask 130048
  %v185 = vsel %vm183, %v176, 0
  %v188 = vsel %vm183, %v177, 0
  %190 = vmatprep.subr.mxu0 0.0
  %191 = vmatpush1.msra.mxu0 %v178
  %192 = vmatprep.subr.mxu0 0.0
  %193 = vmatpush1.msra.mxu0 %v179
  %194 = vmatprep.subr.mxu0 0.0
  %195 = vmatpush1.msra.mxu0 0.0
  %196 = vmatprep.subr.mxu0 0.0
  %197 = vmatpush1.msra.mxu0 0.0
  %198 = vmatprep.subr.mxu0 0.0
  %199 = vmatpush1.msra.mxu0 0.0
  %200 = vmatprep.subr.mxu0 0.0
  %201 = vmatpush1.msra.mxu0 0.0
  %202 = vmatprep.subr.mxu0 0.0
  %203 = vmatpush1.msra.mxu0 0.0
  %204 = vmatprep.subr.mxu0 0.0
  %205 = vmatpush1.msra.mxu0 0.0
  %206 = vmatprep.subr.mxu0 0.0
  %207 = vmatpush1.msra.mxu0 0.0
  %208 = vmatprep.subr.mxu0 0.0
  %209 = vmatpush1.msra.mxu0 0.0
  %210 = vmatprep.subr.mxu0 0.0
  %211 = vmatpush1.msra.mxu0 0.0
  %212 = vmatprep.subr.mxu0 0.0
  %213 = vmatpush1.msra.mxu0 0.0
  %214 = vmatprep.subr.mxu0 0.0
  %215 = vmatpush1.msra.mxu0 0.0
  %216 = vmatprep.subr.mxu0 0.0
  %217 = vmatpush1.msra.mxu0 0.0
  %218 = vmatprep.subr.mxu0 0.0
  %219 = vmatpush1.msra.mxu0 0.0
  %220 = vmatprep.subr.mxu0 0.0
  %221 = vmatpush1.msra.mxu0 0.0
  %222 = vmatprep.subr.mxu0 0.0
  %223 = vmatpush1.msra.mxu0 0.0
  %224 = vmatprep.subr.mxu0 0.0
  %225 = vmatpush1.msra.mxu0 0.0
  %226 = vmatprep.subr.mxu0 0.0
  %227 = vmatpush1.msra.mxu0 0.0
  %228 = vmatprep.subr.mxu0 0.0
  %229 = vmatpush1.msra.mxu0 0.0
  %230 = vmatprep.subr.mxu0 0.0
  %231 = vmatpush1.msra.mxu0 0.0
  %232 = vmatprep.subr.mxu0 0.0
  %233 = vmatpush1.msra.mxu0 0.0
  %234 = vmatprep.subr.mxu0 0.0
  %235 = vmatpush1.msra.mxu0 0.0
  %236 = vmatprep.subr.mxu0 0.0
  %237 = vmatpush1.msra.mxu0 0.0
  %238 = vmatprep.subr.mxu0 0.0
  %239 = vmatpush1.msra.mxu0 0.0
  %240 = vmatprep.subr.mxu0 0.0
  %241 = vmatpush1.msra.mxu0 0.0
  %242 = vmatprep.subr.mxu0 0.0
  %243 = vmatpush1.msra.mxu0 0.0
  %244 = vmatprep.subr.mxu0 0.0
  %245 = vmatpush1.msra.mxu0 0.0
  %246 = vmatprep.subr.mxu0 0.0
  %247 = vmatpush1.msra.mxu0 0.0
  %248 = vmatprep.subr.mxu0 0.0
  %249 = vmatpush1.msra.mxu0 0.0
  %250 = vmatprep.subr.mxu0 0.0
  %251 = vmatpush1.msra.mxu0 0.0
  %252 = vmatprep.subr.mxu0 0.0
  %253 = vmatpush1.msra.mxu0 0.0
  %254 = vmatprep.mubr.f32.mxu0 0.0
  %255 = vmatmul.mubr.f32.gmra.mrb[0].mxu0 %v185
  %v256 = vpop.f32.mrb[0].mxu0
  %v257 = vadd.f32 %v181, %v256
  %v258 = vpop.f32.mrb[0].mxu0
  %259 = vmatprep.mubr.f32.mxu0 0.0
  %260 = vmatmul.mubr.f32.gmra.mrb[0].mxu0 %v188
  %v261 = vpop.f32.mrb[0].mxu0
  %v262 = vadd.f32 %v181, %v261
  %v263 = vpop.f32.mrb[0].mxu0
  %264 = vdwg.mxu0
  %v265 = vmax.f32 %v257, 0.0
  %v266 = vmax.f32 %v262, 0.0
  %v267 = vld [vmem:[%s4] sm:$0xff]
  %v268 = vld [vmem:[%s4 + $0x8] sm:$0xff]
  %v269 = vld [vmem:[%s4 + $0x10] sm:$0xff]
  %v270 = vld [vmem:[%s4 + $0x18] sm:$0xff]
  %271 = vrot.lane.b32.xlu0 %v27, 80
  %v272 = vpop.permute.xlu0 %271
  %vm274 = vcmask 261120
  %v276 = vsel %vm274, %v265, 0
  %v279 = vsel %vm274, %v266, 0
  %281 = vmatprep.subr.mxu0 0.0
  %282 = vmatpush1.msra.mxu0 %v267
  %283 = vmatprep.subr.mxu0 0.0
  %284 = vmatpush1.msra.mxu0 %v268
  %285 = vmatprep.subr.mxu0 0.0
  %286 = vmatpush1.msra.mxu0 %v269
  %287 = vmatprep.subr.mxu0 0.0
  %288 = vmatpush1.msra.mxu0 %v270
  %289 = vmatprep.subr.mxu0 0.0
  %290 = vmatpush1.msra.mxu0 0.0
  %291 = vmatprep.subr.mxu0 0.0
  %292 = vmatpush1.msra.mxu0 0.0
  %293 = vmatprep.subr.mxu0 0.0
  %294 = vmatpush1.msra.mxu0 0.0
  %295 = vmatprep.subr.mxu0 0.0
  %296 = vmatpush1.msra.mxu0 0.0
  %297 = vmatprep.subr.mxu0 0.0
  %298 = vmatpush1.msra.mxu0 0.0
  %299 = vmatprep.subr.mxu0 0.0
  %300 = vmatpush1.msra.mxu0 0.0
  %301 = vmatprep.subr.mxu0 0.0
  %302 = vmatpush1.msra.mxu0 0.0
  %303 = vmatprep.subr.mxu0 0.0
  %304 = vmatpush1.msra.mxu0 0.0
  %305 = vmatprep.subr.mxu0 0.0
  %306 = vmatpush1.msra.mxu0 0.0
  %307 = vmatprep.subr.mxu0 0.0
  %308 = vmatpush1.msra.mxu0 0.0
  %309 = vmatprep.subr.mxu0 0.0
  %310 = vmatpush1.msra.mxu0 0.0
  %311 = vmatprep.subr.mxu0 0.0
  %312 = vmatpush1.msra.mxu0 0.0
  %313 = vmatprep.subr.mxu0 0.0
  %314 = vmatpush1.msra.mxu0 0.0
  %315 = vmatprep.subr.mxu0 0.0
  %316 = vmatpush1.msra.mxu0 0.0
  %317 = vmatprep.subr.mxu0 0.0
  %318 = vmatpush1.msra.mxu0 0.0
  %319 = vmatprep.subr.mxu0 0.0
  %320 = vmatpush1.msra.mxu0 0.0
  %321 = vmatprep.subr.mxu0 0.0
  %322 = vmatpush1.msra.mxu0 0.0
  %323 = vmatprep.subr.mxu0 0.0
  %324 = vmatpush1.msra.mxu0 0.0
  %325 = vmatprep.subr.mxu0 0.0
  %326 = vmatpush1.msra.mxu0 0.0
  %327 = vmatprep.subr.mxu0 0.0
  %328 = vmatpush1.msra.mxu0 0.0
  %329 = vmatprep.subr.mxu0 0.0
  %330 = vmatpush1.msra.mxu0 0.0
  %331 = vmatprep.subr.mxu0 0.0
  %332 = vmatpush1.msra.mxu0 0.0
  %333 = vmatprep.subr.mxu0 0.0
  %334 = vmatpush1.msra.mxu0 0.0
  %335 = vmatprep.subr.mxu0 0.0
  %336 = vmatpush1.msra.mxu0 0.0
  %337 = vmatprep.subr.mxu0 0.0
  %338 = vmatpush1.msra.mxu0 0.0
  %339 = vmatprep.subr.mxu0 0.0
  %340 = vmatpush1.msra.mxu0 0.0
  %341 = vmatprep.subr.mxu0 0.0
  %342 = vmatpush1.msra.mxu0 0.0
  %343 = vmatprep.subr.mxu0 0.0
  %344 = vmatpush1.msra.mxu0 0.0
  %345 = vmatprep.mubr.f32.mxu0 0.0
  %346 = vmatmul.mubr.f32.gmra.mrb[0].mxu0 %v276
  %v347 = vpop.f32.mrb[0].mxu0
  %v348 = vadd.f32 %v272, %v347
  %v349 = vpop.f32.mrb[0].mxu0
  %350 = vmatprep.mubr.f32.mxu0 0.0
  %351 = vmatmul.mubr.f32.gmra.mrb[0].mxu0 %v279
  %v352 = vpop.f32.mrb[0].mxu0
  %v353 = vadd.f32 %v272, %v352
  %v354 = vpop.f32.mrb[0].mxu0
  %355 = vdwg.mxu0
  %358 = vrot.lane.b32.xlu0 %v348, 16
  %v359 = vpop.permute.xlu0 %358
  %360 = vrot.lane.b32.xlu0 %v353, 16
  %v361 = vpop.permute.xlu0 %360
  %v364 = vsel %vm183, %v176, %v359
  %v365 = vsel %vm183, %v177, %v361
  %366 = vst.msk [vmem:[%s5] sm:$0xff] %vm274, %v364
  %367 = vst.msk [vmem:[%s5 + $0x8] sm:$0xff] %vm274, %v365
  // Predicated region
  $region22: #{_decoder_forward.1} parent=0 // pred_check
    _
  $region23: #{_decoder_forward.1} parent=0 // pred_check_branch
    %369 = sbr.rel (0) target = $region25
  $region24: #{_decoder_forward.1} parent=0 // pred_region
    _
  $region25: #{_decoder_forward.1} parent=0 // pred_fallthru
    _
  // Predicated region
  $region26: #{_decoder_forward.1} parent=0 // pred_check
    _
  $region27: #{_decoder_forward.1} parent=0 // pred_check_branch
    %371 = sbr.rel (0) target = $region29
  $region28: #{_decoder_forward.1} parent=0 // pred_region
    _
  $region29: #{_decoder_forward.1} parent=0 // pred_fallthru
    _

</llo_original>
